<compile_context>
chip_gen: v6e
topology: v6e:2x2x1
jax: 0.10.0
libtpu: 0.0.40
codegen_flags: <defaults>
</compile_context>

<pallas_src>
import functools
import math

import jax
import jax.numpy as jnp
from jax.experimental import pallas as pl
from jax.experimental.pallas import tpu as pltpu

LOG_STD_MAX = 2.0
LOG_STD_MIN = -20.0
_HALF_LOG_2PI = 0.5 * math.log(2.0 * math.pi)


def _round_up(x, m):
    return (x + m - 1) // m * m


def _cdiv(a, b):
    return -(-a // b)


def _policy_kernel(xin_ref, p_ref, out_ref, *, obs_dim, h1, h2, action_dim,
                   offs):
    o_w1, o_w2, o_w3, o_b1, o_b2, o_b3 = offs
    A = action_dim

    # Fused [obs | eps] input slab -> static lane slices.
    x = xin_ref[:, 0:obs_dim]
    eps = xin_ref[:, obs_dim:obs_dim + A]

    # Static, 8-aligned row slices of the packed, VMEM-resident param buffer.
    w1 = p_ref[o_w1:o_w1 + obs_dim, 0:h1]
    w2 = p_ref[o_w2:o_w2 + h1, 0:h2]
    w3 = p_ref[o_w3:o_w3 + h2, 0:2 * A]
    b1 = p_ref[o_b1:o_b1 + 1, 0:h1]
    b2 = p_ref[o_b2:o_b2 + 1, 0:h2]
    b3 = p_ref[o_b3:o_b3 + 1, 0:2 * A]

    # --- MLP: Linear -> ReLU -> Linear -> ReLU -> Linear -> Tanh ---
    hid1 = jnp.maximum(
        jnp.dot(x, w1, preferred_element_type=jnp.float32) + b1, 0.0)
    hid2 = jnp.maximum(
        jnp.dot(hid1, w2, preferred_element_type=jnp.float32) + b2, 0.0)
    head = jnp.tanh(
        jnp.dot(hid2, w3, preferred_element_type=jnp.float32) + b3)

    # chunk(2, dim=1)
    mu = head[:, 0:A]
    log_std = head[:, A:2 * A]
    log_std = jnp.clip(log_std, LOG_STD_MIN, LOG_STD_MAX)
    std = jnp.exp(log_std)

    # rsample of TransformedDistribution(Normal(mu, std), [TanhTransform])
    z = mu + std * eps            # pre-tanh base-Normal sample
    action = jnp.tanh(z)
    mean = jnp.tanh(mu)           # torch.tanh(mu) on the already-tanh'd head

    # Normal(mu, std).log_prob(z) with z = mu + std*eps:
    #   -(eps^2)/2 - log_std - 0.5*log(2*pi)
    logp_base = -0.5 * eps * eps - log_std - _HALF_LOG_2PI
    # PyTorch TanhTransform.log_abs_det_jacobian (numerically stable form).
    log_det = 2.0 * (math.log(2.0) - z - jax.nn.softplus(-2.0 * z))
    logp = jnp.sum(logp_base - log_det, axis=-1, keepdims=True)

    # Single fused output slab: [action | mean | logp].
    out_ref[...] = jnp.concatenate([action, mean, logp], axis=-1)


def pack_params(params, obs_dim, hidden_sizes, action_dim):
    """Pack (w1,b1,w2,b2,w3,b3) into ONE lane-dense f32 buffer.

    Call this ONCE per parameter set (outside the hot path) and reuse the
    returned (buffer, offsets).  Rows: w1 | w2 | w3 | b1 | b2 | b3, every
    block starting at an 8-aligned row; columns padded to a multiple of 128.
    """
    w1, b1, w2, b2, w3, b3 = params
    h1, h2 = hidden_sizes
    out_dim = 2 * action_dim
    cmax = _round_up(max(h1, h2, out_dim), 128)

    o_w1 = 0
    o_w2 = _round_up(o_w1 + obs_dim, 8)
    o_w3 = _round_up(o_w2 + h1, 8)
    o_b1 = _round_up(o_w3 + h2, 8)
    o_b2 = o_b1 + 8
    o_b3 = o_b2 + 8
    rows = _round_up(o_b3 + 1, 8)

    buf = jnp.zeros((rows, cmax), jnp.float32)
    buf = buf.at[o_w1:o_w1 + obs_dim, :h1].set(w1)
    buf = buf.at[o_w2:o_w2 + h1, :h2].set(w2)
    buf = buf.at[o_w3:o_w3 + h2, :out_dim].set(w3)
    buf = buf.at[o_b1, :h1].set(b1[0])
    buf = buf.at[o_b2, :h2].set(b2[0])
    buf = buf.at[o_b3, :out_dim].set(b3[0])
    return buf, (o_w1, o_w2, o_w3, o_b1, o_b2, o_b3)


def _choose_tiling(batch, tb_max):
    """Pick (tile_rows, padded_batch)."""
    b8 = _round_up(batch, 8)
    num_tiles = max(1, _cdiv(b8, tb_max))
    # v7x has 2 TensorCores: keep >= 2 grid steps on the "parallel" batch axis
    # once the batch is big enough that splitting it is essentially free.
    if num_tiles == 1 and b8 >= 1024:
        num_tiles = 2
    tb = _round_up(_cdiv(b8, num_tiles), 8)
    return tb, num_tiles * tb


@functools.partial(
    jax.jit, static_argnames=("offs", "action_dim", "hidden_sizes", "tb_max"))
def stochastic_policy_forward(obs, eps, pbuf, offs, action_dim, hidden_sizes,
                              tb_max=2048):
    """obs: [B, obs_dim] f32; eps: [B, action_dim] f32 standard-normal noise.

    pbuf/offs come from `pack_params` (computed once, outside the hot path).
    Returns (action, logp_a, mean) exactly like StochasticPolicy.forward.
    """
    batch, obs_dim = obs.shape
    h1, h2 = hidden_sizes
    A = action_dim
    in_dim = obs_dim + A
    out_dim = 2 * A + 1

    tb, b_pad = _choose_tiling(batch, tb_max)
    num_tiles = b_pad // tb

    xin = jnp.concatenate([obs, eps], axis=-1)
    if b_pad != batch:
        xin = jnp.pad(xin, ((0, b_pad - batch), (0, 0)))

    kernel = functools.partial(
        _policy_kernel, obs_dim=obs_dim, h1=h1, h2=h2, action_dim=A, offs=offs)

    flops = 2 * b_pad * (obs_dim * h1 + h1 * h2 + h2 * 2 * A)
    # tanh(head): 2A, exp: A, tanh(z): A, tanh(mu): A, softplus ~ 2A, margin.
    transcendentals = 8 * A * b_pad
    bytes_accessed = 4 * (b_pad * (in_dim + out_dim) + int(pbuf.size))

    # ~512 B/row per buffered stream (everything lane-pads to 128) plus
    # elementwise temporaries; stays below v7x's 64 MiB physical VMEM while
    # raising v5e's 16 MiB scoped default when the tile is large.
    vmem_limit = int(min(48 << 20, max(16 << 20, tb * 8 * 1024 + (4 << 20))))

    fused = pl.pallas_call(
        kernel,
        out_shape=jax.ShapeDtypeStruct((b_pad, out_dim), jnp.float32),
        grid=(num_tiles,),
        in_specs=[
            pl.BlockSpec((tb, in_dim), lambda i: (i, 0)),   # [obs|eps] tiles
            pl.BlockSpec(pbuf.shape, lambda i: (0, 0)),     # params resident
        ],
        out_specs=pl.BlockSpec((tb, out_dim), lambda i: (i, 0)),
        compiler_params=pltpu.CompilerParams(
            dimension_semantics=("parallel",),
            vmem_limit_bytes=vmem_limit),
        cost_estimate=pl.CostEstimate(
            flops=int(flops),
            transcendentals=int(transcendentals),
            bytes_accessed=int(bytes_accessed)),
    )(xin, pbuf)

    action = fused[:batch, 0:A]
    mean = fused[:batch, A:2 * A]
    logp = fused[:batch, 2 * A:2 * A + 1]
    return action, logp, mean


def init_params(key, obs_dim, hidden_sizes, action_dim):
    """Deterministic synthetic init (Linear weights [in, out], biases [1, out])."""
    sizes = [obs_dim] + list(hidden_sizes) + [action_dim * 2]
    params = []
    for i in range(len(sizes) - 1):
        key, kw, kb = jax.random.split(key, 3)
        bound = 1.0 / math.sqrt(sizes[i])
        w = jax.random.uniform(kw, (sizes[i], sizes[i + 1]), jnp.float32,
                               -bound, bound)
        b = jax.random.uniform(kb, (1, sizes[i + 1]), jnp.float32,
                               -bound, bound)
        params += [w, b]
    return tuple(params)


# Pure-JAX reference (mirrors the PyTorch StochasticPolicy.forward exactly).
def _reference_forward(obs, params, eps, action_dim):
    w1, b1, w2, b2, w3, b3 = params
    h1 = jnp.maximum(obs @ w1 + b1, 0.0)
    h2 = jnp.maximum(h1 @ w2 + b2, 0.0)
    out = jnp.tanh(h2 @ w3 + b3)
    mu, log_std = out[:, :action_dim], out[:, action_dim:]
    log_std = jnp.clip(log_std, LOG_STD_MIN, LOG_STD_MAX)
    std = jnp.exp(log_std)
    z = mu + std * eps
    action = jnp.tanh(z)
    logp_base = -0.5 * eps * eps - log_std - _HALF_LOG_2PI
    log_det = 2.0 * (math.log(2.0) - z - jax.nn.softplus(-2.0 * z))
    logp = jnp.sum(logp_base - log_det, axis=-1, keepdims=True)
    return action, logp, jnp.tanh(mu)


if __name__ == "__main__":
    obs_dim = 16
    action_dim = 4
    hidden_sizes = (32, 32)

    key = jax.random.PRNGKey(0)
    key, k_obs, k_eps, k_par = jax.random.split(key, 4)
    params = init_params(k_par, obs_dim, hidden_sizes, action_dim)

    # Pack the parameters ONCE (hoisted out of the forward path).
    pbuf, offs = pack_params(params, obs_dim, hidden_sizes, action_dim)
    pbuf = jax.block_until_ready(pbuf)

    # --- small-shape check (single tile) ---
    batch = 8
    obs = jax.random.normal(k_obs, (batch, obs_dim), jnp.float32)
    eps = jax.random.normal(k_eps, (batch, action_dim), jnp.float32)

    action, logp_a, mean = stochastic_policy_forward(
        obs, eps, pbuf, offs=offs, action_dim=action_dim,
        hidden_sizes=hidden_sizes)
    jax.block_until_ready((action, logp_a, mean))

    ref_action, ref_logp, ref_mean = _reference_forward(obs, params, eps,
                                                        action_dim)
    assert jnp.allclose(action, ref_action, atol=1e-5), "action mismatch"
    assert jnp.allclose(logp_a, ref_logp, atol=1e-4), "logp mismatch"
    assert jnp.allclose(mean, ref_mean, atol=1e-5), "mean mismatch"

    # --- multi-tile check (exercises grid pipelining + batch padding) ---
    key, k_obs2, k_eps2 = jax.random.split(key, 3)
    batch2 = 200
    obs2 = jax.random.normal(k_obs2, (batch2, obs_dim), jnp.float32)
    eps2 = jax.random.normal(k_eps2, (batch2, action_dim), jnp.float32)
    a2, lp2, m2 = stochastic_policy_forward(
        obs2, eps2, pbuf, offs=offs, action_dim=action_dim,
        hidden_sizes=hidden_sizes, tb_max=64)
    jax.block_until_ready((a2, lp2, m2))
    ra2, rlp2, rm2 = _reference_forward(obs2, params, eps2, action_dim)
    assert jnp.allclose(a2, ra2, atol=1e-5), "tiled action mismatch"
    assert jnp.allclose(lp2, rlp2, atol=1e-4), "tiled logp mismatch"
    assert jnp.allclose(m2, rm2, atol=1e-5), "tiled mean mismatch"

    print("KERNEL_OK")
</pallas_src>

<mosaic_0001>
module attributes {stable_mosaic.version = 11 : i64} {
  func.func @_policy_kernel(%arg0: i32, %arg1: memref<8x20xf32, #tpu.memory_space<vmem>>, %arg2: memref<104x128xf32, #tpu.memory_space<vmem>>, %arg3: memref<8x9xf32, #tpu.memory_space<vmem>>) attributes {dimension_semantics = [#tpu.dimension_semantics<parallel>], iteration_bounds = array<i64: 1>, scalar_prefetch = 0 : i64, scratch_operands = 0 : i64, tpu.core_type = #tpu.core_type<tc>, window_params = [{transform_indices = @transform_0, window_bounds = array<i64: 8, 20>}, {pipeline_mode = #tpu.pipeline_mode<synchronous>, transform_indices = @transform_1, window_bounds = array<i64: 104, 128>}, {transform_indices = @transform_2, window_bounds = array<i64: 8, 9>}]} {
    %c0 = arith.constant 0 : index
    %c0_0 = arith.constant 0 : index
    %0 = vector.load %arg1[%c0, %c0_0] : memref<8x20xf32, #tpu.memory_space<vmem>>, vector<8x16xf32>
    %c0_1 = arith.constant 0 : index
    %c16 = arith.constant 16 : index
    %1 = vector.load %arg1[%c0_1, %c16] : memref<8x20xf32, #tpu.memory_space<vmem>>, vector<8x4xf32>
    %c0_2 = arith.constant 0 : index
    %c0_3 = arith.constant 0 : index
    %2 = vector.load %arg2[%c0_2, %c0_3] : memref<104x128xf32, #tpu.memory_space<vmem>>, vector<16x32xf32>
    %c16_4 = arith.constant 16 : index
    %c0_5 = arith.constant 0 : index
    %3 = vector.load %arg2[%c16_4, %c0_5] : memref<104x128xf32, #tpu.memory_space<vmem>>, vector<32x32xf32>
    %c48 = arith.constant 48 : index
    %c0_6 = arith.constant 0 : index
    %4 = vector.load %arg2[%c48, %c0_6] : memref<104x128xf32, #tpu.memory_space<vmem>>, vector<32x8xf32>
    %c80 = arith.constant 80 : index
    %c0_7 = arith.constant 0 : index
    %5 = vector.load %arg2[%c80, %c0_7] : memref<104x128xf32, #tpu.memory_space<vmem>>, vector<1x32xf32>
    %c88 = arith.constant 88 : index
    %c0_8 = arith.constant 0 : index
    %6 = vector.load %arg2[%c88, %c0_8] : memref<104x128xf32, #tpu.memory_space<vmem>>, vector<1x32xf32>
    %c96 = arith.constant 96 : index
    %c0_9 = arith.constant 0 : index
    %7 = vector.load %arg2[%c96, %c0_9] : memref<104x128xf32, #tpu.memory_space<vmem>>, vector<1x8xf32>
    %cst = arith.constant dense<0.000000e+00> : vector<8x32xf32>
    %8 = tpu.matmul %0, %2, %cst {dimension_numbers = #tpu.dot_dimension_numbers<[1], [0], [0], [1], [0, 0, 1, 1], [], []>} : vector<8x16xf32>, vector<16x32xf32>, vector<8x32xf32> -> vector<8x32xf32>
    %9 = vector.broadcast %5 : vector<1x32xf32> to vector<8x32xf32>
    %10 = arith.addf %8, %9 : vector<8x32xf32>
    %cst_10 = arith.constant 0.000000e+00 : f32
    %11 = vector.broadcast %cst_10 : f32 to vector<8x32xf32>
    %12 = arith.maximumf %10, %11 : vector<8x32xf32>
    %cst_11 = arith.constant dense<0.000000e+00> : vector<8x32xf32>
    %13 = tpu.matmul %12, %3, %cst_11 {dimension_numbers = #tpu.dot_dimension_numbers<[1], [0], [0], [1], [0, 0, 1, 1], [], []>} : vector<8x32xf32>, vector<32x32xf32>, vector<8x32xf32> -> vector<8x32xf32>
    %14 = vector.broadcast %6 : vector<1x32xf32> to vector<8x32xf32>
    %15 = arith.addf %13, %14 : vector<8x32xf32>
    %cst_12 = arith.constant 0.000000e+00 : f32
    %16 = vector.broadcast %cst_12 : f32 to vector<8x32xf32>
    %17 = arith.maximumf %15, %16 : vector<8x32xf32>
    %cst_13 = arith.constant dense<0.000000e+00> : vector<8x8xf32>
    %18 = tpu.matmul %17, %4, %cst_13 {dimension_numbers = #tpu.dot_dimension_numbers<[1], [0], [0], [1], [0, 0, 1, 1], [], []>} : vector<8x32xf32>, vector<32x8xf32>, vector<8x8xf32> -> vector<8x8xf32>
    %19 = vector.broadcast %7 : vector<1x8xf32> to vector<8x8xf32>
    %20 = arith.addf %18, %19 : vector<8x8xf32>
    %21 = math.tanh %20 : vector<8x8xf32>
    %22 = vector.extract_strided_slice %21 {offsets = [0, 0], sizes = [8, 4], strides = [1, 1]} : vector<8x8xf32> to vector<8x4xf32>
    %23 = vector.extract_strided_slice %21 {offsets = [0, 4], sizes = [8, 4], strides = [1, 1]} : vector<8x8xf32> to vector<8x4xf32>
    %cst_14 = arith.constant -2.000000e+01 : f32
    %cst_15 = arith.constant 2.000000e+00 : f32
    %24 = vector.broadcast %cst_14 : f32 to vector<8x4xf32>
    %25 = arith.maximumf %24, %23 : vector<8x4xf32>
    %26 = vector.broadcast %cst_15 : f32 to vector<8x4xf32>
    %27 = arith.minimumf %26, %25 : vector<8x4xf32>
    %28 = math.exp %27 : vector<8x4xf32>
    %29 = arith.mulf %28, %1 : vector<8x4xf32>
    %30 = arith.addf %22, %29 : vector<8x4xf32>
    %31 = math.tanh %30 : vector<8x4xf32>
    %32 = math.tanh %22 : vector<8x4xf32>
    %cst_16 = arith.constant -5.000000e-01 : f32
    %33 = vector.broadcast %cst_16 : f32 to vector<8x4xf32>
    %34 = arith.mulf %33, %1 : vector<8x4xf32>
    %35 = arith.mulf %34, %1 : vector<8x4xf32>
    %36 = arith.subf %35, %27 : vector<8x4xf32>
    %cst_17 = arith.constant 0.918938517 : f32
    %37 = vector.broadcast %cst_17 : f32 to vector<8x4xf32>
    %38 = arith.subf %36, %37 : vector<8x4xf32>
    %cst_18 = arith.constant 0.693147182 : f32
    %39 = vector.broadcast %cst_18 : f32 to vector<8x4xf32>
    %40 = arith.subf %39, %30 : vector<8x4xf32>
    %cst_19 = arith.constant -2.000000e+00 : f32
    %41 = vector.broadcast %cst_19 : f32 to vector<8x4xf32>
    %42 = arith.mulf %41, %30 : vector<8x4xf32>
    %cst_20 = arith.constant 0.000000e+00 : f32
    %43 = vector.broadcast %cst_20 : f32 to vector<8x4xf32>
    %44 = arith.maximumf %42, %43 : vector<8x4xf32>
    %45 = vector.broadcast %cst_20 : f32 to vector<8x4xf32>
    %46 = arith.subf %42, %45 : vector<8x4xf32>
    %47 = arith.cmpf one, %46, %46 : vector<8x4xf32>
    %48 = vector.broadcast %cst_20 : f32 to vector<8x4xf32>
    %49 = arith.addf %42, %48 : vector<8x4xf32>
    %50 = math.absf %46 : vector<8x4xf32>
    %cst_21 = arith.constant 0.000000e+00 : f32
    %51 = vector.broadcast %cst_21 : f32 to vector<8x4xf32>
    %52 = arith.subf %51, %50 : vector<8x4xf32>
    %53 = math.exp %52 : vector<8x4xf32>
    %54 = math.log1p %53 : vector<8x4xf32>
    %55 = arith.addf %44, %54 : vector<8x4xf32>
    %56 = arith.select %47, %49, %55 : vector<8x4xi1>, vector<8x4xf32>
    %57 = arith.subf %40, %56 : vector<8x4xf32>
    %cst_22 = arith.constant 2.000000e+00 : f32
    %58 = vector.broadcast %cst_22 : f32 to vector<8x4xf32>
    %59 = arith.mulf %58, %57 : vector<8x4xf32>
    %60 = arith.subf %38, %59 : vector<8x4xf32>
    %cst_23 = arith.constant dense<0.000000e+00> : vector<8xf32>
    %61 = vector.multi_reduction <add>, %60, %cst_23 [1] : vector<8x4xf32> to vector<8xf32>
    %62 = vector.shape_cast %61 : vector<8xf32> to vector<8x1xf32>
    %63 = tpu.concatenate %31, %32, %62 in 1 : vector<8x4xf32>, vector<8x4xf32>, vector<8x1xf32> -> vector<8x9xf32>
    %c0_24 = arith.constant 0 : index
    %c0_25 = arith.constant 0 : index
    %64 = vector.load %arg3[%c0_24, %c0_25] : memref<8x9xf32, #tpu.memory_space<vmem>>, vector<8x9xf32>
    tpu.vector_store %arg3[%c0_24, %c0_25], %63 {strides = array<i32>} : memref<8x9xf32, #tpu.memory_space<vmem>>, vector<8x9xf32>,
    return
  }
  func.func @transform_0(%arg0: i32) -> (i32, i32) {
    %c0_i32 = arith.constant 0 : i32
    %c0_i32_0 = arith.constant 0 : i32
    return %arg0, %c0_i32 : i32, i32
  }
  func.func @transform_1(%arg0: i32) -> (i32, i32) {
    %c0_i32 = arith.constant 0 : i32
    %c0_i32_0 = arith.constant 0 : i32
    %c0_i32_1 = arith.constant 0 : i32
    return %c0_i32, %c0_i32_0 : i32, i32
  }
  func.func @transform_2(%arg0: i32) -> (i32, i32) {
    %c0_i32 = arith.constant 0 : i32
    %c0_i32_0 = arith.constant 0 : i32
    return %arg0, %c0_i32 : i32, i32
  }
}

</mosaic_0001>

<llo_original>
// kernel: stochastic_policy_forward.1
$region0: #{stochastic_policy_forward.1}
  #allocation0 [shape = 'u32[]', space=smem, size = 0x4, offset = 0x4, fixed_abs, tag = 'smem constant byte address 0x4 - core index']
  #allocation1 [shape = 'u32[144,128]{1,0:T(1,128)}', space=vmem, size = 0x12000, scoped, tag = 'internal scratch']
  %s0 = inlined_call_operand.vmem [shape: f32[8,20], index: 0, kind: input, shape index: {}]
  %s1 = inlined_call_operand.hbm [shape: f32[104,128], index: 1, kind: input, shape index: {}]
  %s2 = inlined_call_operand.vmem [shape: f32[8,9], index: 2, kind: output, shape index: {}]
  %s3 = sld [smem:[#allocation0]]
  $region22: #{stochastic_policy_forward.1} parent=0
    _
  %s5 = ssub.s32 1, %s3
  %s6 = scalar_select 0, %s5, %s3
  $region1: #{stochastic_policy_forward.1} parent=0
    #allocation2 [shape = 'u8[53248]{0}', space=vmem, size = 0xd000, scoped, tag = 'input window, operand 1, single buffered']
    #allocation3 [shape = 's32[1]{0}', space=sflag, size = 0x4, scoped, tag = 'scoped memory for stochastic_policy_forward.1']
    %7 = vsyncpa [#allocation3], 0
    // Predicated region
    $region2: #{stochastic_policy_forward.1} parent=1 // pred_check
      _
    $region3: #{stochastic_policy_forward.1} parent=1 // pred_check_branch
      %9 = sbr.rel (0) target = $region5
    $region4: #{stochastic_policy_forward.1} parent=1 // pred_region
      _
    $region5: #{stochastic_policy_forward.1} parent=1 // pred_fallthru
      _
    // Predicated region
    $region6: #{stochastic_policy_forward.1} parent=1 // pred_check
      _
    $region7: #{stochastic_policy_forward.1} parent=1 // pred_check_branch
      %11 = sbr.rel (0) target = $region9
    $region8: #{stochastic_policy_forward.1} parent=1 // pred_region
      %s13 = ssub.s32 1664, 1664
      %14 = vsyncadd [#allocation3], %s13
      %s15 = sshll.u32 [#allocation2], 4
      %s16 = int_to_ptr.vmem [resolvable:$true] %s15
      %21 = dma.hbm_to_vmem [thread:$0]  %s1, 1664, %s16, [#allocation3], 128, 128, 8
    $region9: #{stochastic_policy_forward.1} parent=1 // pred_fallthru
      _
    // Predicated region
    $region10: #{stochastic_policy_forward.1} parent=1 // pred_check
      _
    $region11: #{stochastic_policy_forward.1} parent=1 // pred_check_branch
      %23 = sbr.rel (0) target = $region13
    $region12: #{stochastic_policy_forward.1} parent=1 // pred_region
      %24 = dma.done [#allocation3], 1664
    $region13: #{stochastic_policy_forward.1} parent=1 // pred_fallthru
      _
    %v25 = vld [vmem:[%s0] sm:$0xff]
    %v26 = vld [vmem:[#allocation2] sm:$0xff]
    %v27 = vld [vmem:[#allocation2 + $0x8] sm:$0xff]
    %v28 = vld [vmem:[#allocation2 + $0x10] sm:$0xff]
    %v29 = vld [vmem:[#allocation2 + $0x18] sm:$0xff]
    %v30 = vld [vmem:[#allocation2 + $0x20] sm:$0xff]
    %v31 = vld [vmem:[#allocation2 + $0x28] sm:$0xff]
    %v32 = vld [vmem:[#allocation2 + $0x30] sm:$0xff]
    %v33 = vld [vmem:[#allocation2 + $0x38] sm:$0xff]
    %v34 = vld [vmem:[#allocation2 + $0x40] sm:$0xff]
    %v35 = vld [vmem:[#allocation2 + $0x48] sm:$0xff]
    %v36 = vld [vmem:[#allocation2 + $0x50] sm:$0x1]
    %v37 = vld [vmem:[#allocation2 + $0x58] sm:$0x1]
    %v38 = vld [vmem:[#allocation2 + $0x60] sm:$0x1]
    %v39 = vlaneseq
    %v40 = vshrl.u32 %v39, 7
    %v41 = vsub.s32 0, %v40
    %v42 = vrot.slane %v36, %v41
    %vm43 = vcmask 130048
    %v45 = vsel %vm43, %v25, 0
    %47 = vmatprep.subr.mxu0 0.0
    %48 = vmatpush1.msra.mxu0 0.0
    %49 = vmatprep.subr.mxu0 0.0
    %50 = vmatpush1.msra.mxu0 0.0
    %51 = vmatprep.subr.mxu0 0.0
    %52 = vmatpush1.msra.mxu0 0.0
    %53 = vmatprep.subr.mxu0 0.0
    %54 = vmatpush1.msra.mxu0 0.0
    %55 = vmatprep.subr.mxu0 0.0
    %56 = vmatpush1.msra.mxu0 0.0
    %57 = vmatprep.subr.mxu0 0.0
    %58 = vmatpush1.msra.mxu0 0.0
    %59 = vmatprep.subr.mxu0 0.0
    %60 = vmatpush1.msra.mxu0 0.0
    %61 = vmatprep.subr.mxu0 0.0
    %62 = vmatpush1.msra.mxu0 0.0
    %63 = vmatprep.subr.mxu0 0.0
    %64 = vmatpush1.msra.mxu0 0.0
    %65 = vmatprep.subr.mxu0 0.0
    %66 = vmatpush1.msra.mxu0 0.0
    %67 = vmatprep.subr.mxu0 0.0
    %68 = vmatpush1.msra.mxu0 0.0
    %69 = vmatprep.subr.mxu0 0.0
    %70 = vmatpush1.msra.mxu0 0.0
    %71 = vmatprep.subr.mxu0 0.0
    %72 = vmatpush1.msra.mxu0 0.0
    %73 = vmatprep.subr.mxu0 0.0
    %74 = vmatpush1.msra.mxu0 0.0
    %75 = vmatprep.subr.mxu0 0.0
    %76 = vmatpush1.msra.mxu0 %v27
    %77 = vmatprep.subr.mxu0 0.0
    %78 = vmatpush1.msra.mxu0 %v26
    %79 = vmatprep.subr.mxu0 0.0
    %80 = vmatpush2.msra.mxu0 0.0
    %81 = vmatprep.subr.mxu0 0.0
    %82 = vmatpush2.msra.mxu0 0.0
    %83 = vmatprep.subr.mxu0 0.0
    %84 = vmatpush2.msra.mxu0 0.0
    %85 = vmatprep.subr.mxu0 0.0
    %86 = vmatpush2.msra.mxu0 0.0
    %87 = vmatprep.subr.mxu0 0.0
    %88 = vmatpush2.msra.mxu0 0.0
    %89 = vmatprep.subr.mxu0 0.0
    %90 = vmatpush2.msra.mxu0 0.0
    %91 = vmatprep.subr.mxu0 0.0
    %92 = vmatpush2.msra.mxu0 0.0
    %93 = vmatprep.subr.mxu0 0.0
    %94 = vmatpush2.msra.mxu0 0.0
    %95 = vmatprep.subr.mxu0 0.0
    %96 = vmatpush2.msra.mxu0 0.0
    %97 = vmatprep.subr.mxu0 0.0
    %98 = vmatpush2.msra.mxu0 0.0
    %99 = vmatprep.subr.mxu0 0.0
    %100 = vmatpush2.msra.mxu0 0.0
    %101 = vmatprep.subr.mxu0 0.0
    %102 = vmatpush2.msra.mxu0 0.0
    %103 = vmatprep.subr.mxu0 0.0
    %104 = vmatpush2.msra.mxu0 0.0
    %105 = vmatprep.subr.mxu0 0.0
    %106 = vmatpush2.msra.mxu0 0.0
    %107 = vmatprep.subr.mxu0 0.0
    %108 = vmatpush2.msra.mxu0 0.0
    %109 = vmatprep.subr.mxu0 0.0
    %110 = vmatpush2.msra.mxu0 0.0
    %111 = vmatprep.mubr.f32.mxu0 0.0
    %112 = vmatmul.mubr.f32.gmra.mxu0 %v45
    %v113 = vpop.f32.mrf.mxu0
    %v114 = vadd.f32 %v42, %v113
    %v115 = vpop.f32.mrf.mxu0
    %116 = vdwg.mxu0
    %v117 = vmax.f32 %v114, 0.0
    %v118 = vlaneseq
    %v119 = vshrl.u32 %v118, 7
    %v120 = vsub.s32 0, %v119
    %v121 = vrot.slane %v37, %v120
    %vm122 = vcmask 261120
    %v124 = vsel %vm122, %v117, 0
    %126 = vmatprep.subr.mxu0 0.0
    %127 = vmatpush1.msra.mxu0 0.0
    %128 = vmatprep.subr.mxu0 0.0
    %129 = vmatpush1.msra.mxu0 0.0
    %130 = vmatprep.subr.mxu0 0.0
    %131 = vmatpush1.msra.mxu0 0.0
    %132 = vmatprep.subr.mxu0 0.0
    %133 = vmatpush1.msra.mxu0 0.0
    %134 = vmatprep.subr.mxu0 0.0
    %135 = vmatpush1.msra.mxu0 0.0
    %136 = vmatprep.subr.mxu0 0.0
    %137 = vmatpush1.msra.mxu0 0.0
    %138 = vmatprep.subr.mxu0 0.0
    %139 = vmatpush1.msra.mxu0 0.0
    %140 = vmatprep.subr.mxu0 0.0
    %141 = vmatpush1.msra.mxu0 0.0
    %142 = vmatprep.subr.mxu0 0.0
    %143 = vmatpush1.msra.mxu0 0.0
    %144 = vmatprep.subr.mxu0 0.0
    %145 = vmatpush1.msra.mxu0 0.0
    %146 = vmatprep.subr.mxu0 0.0
    %147 = vmatpush1.msra.mxu0 0.0
    %148 = vmatprep.subr.mxu0 0.0
    %149 = vmatpush1.msra.mxu0 0.0
    %150 = vmatprep.subr.mxu0 0.0
    %151 = vmatpush1.msra.mxu0 %v31
    %152 = vmatprep.subr.mxu0 0.0
    %153 = vmatpush1.msra.mxu0 %v30
    %154 = vmatprep.subr.mxu0 0.0
    %155 = vmatpush1.msra.mxu0 %v29
    %156 = vmatprep.subr.mxu0 0.0
    %157 = vmatpush1.msra.mxu0 %v28
    %158 = vmatprep.subr.mxu0 0.0
    %159 = vmatpush2.msra.mxu0 0.0
    %160 = vmatprep.subr.mxu0 0.0
    %161 = vmatpush2.msra.mxu0 0.0
    %162 = vmatprep.subr.mxu0 0.0
    %163 = vmatpush2.msra.mxu0 0.0
    %164 = vmatprep.subr.mxu0 0.0
    %165 = vmatpush2.msra.mxu0 0.0
    %166 = vmatprep.subr.mxu0 0.0
    %167 = vmatpush2.msra.mxu0 0.0
    %168 = vmatprep.subr.mxu0 0.0
    %169 = vmatpush2.msra.mxu0 0.0
    %170 = vmatprep.subr.mxu0 0.0
    %171 = vmatpush2.msra.mxu0 0.0
    %172 = vmatprep.subr.mxu0 0.0
    %173 = vmatpush2.msra.mxu0 0.0
    %174 = vmatprep.subr.mxu0 0.0
    %175 = vmatpush2.msra.mxu0 0.0
    %176 = vmatprep.subr.mxu0 0.0
    %177 = vmatpush2.msra.mxu0 0.0
    %178 = vmatprep.subr.mxu0 0.0
    %179 = vmatpush2.msra.mxu0 0.0
    %180 = vmatprep.subr.mxu0 0.0
    %181 = vmatpush2.msra.mxu0 0.0
    %182 = vmatprep.subr.mxu0 0.0
    %183 = vmatpush2.msra.mxu0 0.0
    %184 = vmatprep.subr.mxu0 0.0
    %185 = vmatpush2.msra.mxu0 0.0
    %186 = vmatprep.subr.mxu0 0.0
    %187 = vmatpush2.msra.mxu0 0.0
    %188 = vmatprep.subr.mxu0 0.0
    %189 = vmatpush2.msra.mxu0 0.0
    %190 = vmatprep.mubr.f32.mxu0 0.0
    %191 = vmatmul.mubr.f32.gmra.mxu0 %v124
    %v192 = vpop.f32.mrf.mxu0
    %v193 = vadd.f32 %v121, %v192
    %v194 = vpop.f32.mrf.mxu0
    %195 = vdwg.mxu0
    %v196 = vmax.f32 %v193, 0.0
    %v197 = vlaneseq
    %v198 = vshrl.u32 %v197, 7
    %v199 = vsub.s32 0, %v198
    %v200 = vrot.slane %v38, %v199
    %v202 = vsel %vm122, %v196, 0
    %204 = vmatprep.subr.mxu0 0.0
    %205 = vmatpush1.msra.mxu0 0.0
    %206 = vmatprep.subr.mxu0 0.0
    %207 = vmatpush1.msra.mxu0 0.0
    %208 = vmatprep.subr.mxu0 0.0
    %209 = vmatpush1.msra.mxu0 0.0
    %210 = vmatprep.subr.mxu0 0.0
    %211 = vmatpush1.msra.mxu0 0.0
    %212 = vmatprep.subr.mxu0 0.0
    %213 = vmatpush1.msra.mxu0 0.0
    %214 = vmatprep.subr.mxu0 0.0
    %215 = vmatpush1.msra.mxu0 0.0
    %216 = vmatprep.subr.mxu0 0.0
    %217 = vmatpush1.msra.mxu0 0.0
    %218 = vmatprep.subr.mxu0 0.0
    %219 = vmatpush1.msra.mxu0 0.0
    %220 = vmatprep.subr.mxu0 0.0
    %221 = vmatpush1.msra.mxu0 0.0
    %222 = vmatprep.subr.mxu0 0.0
    %223 = vmatpush1.msra.mxu0 0.0
    %224 = vmatprep.subr.mxu0 0.0
    %225 = vmatpush1.msra.mxu0 0.0
    %226 = vmatprep.subr.mxu0 0.0
    %227 = vmatpush1.msra.mxu0 0.0
    %228 = vmatprep.subr.mxu0 0.0
    %229 = vmatpush1.msra.mxu0 %v35
    %230 = vmatprep.subr.mxu0 0.0
    %231 = vmatpush1.msra.mxu0 %v34
    %232 = vmatprep.subr.mxu0 0.0
    %233 = vmatpush1.msra.mxu0 %v33
    %234 = vmatprep.subr.mxu0 0.0
    %235 = vmatpush1.msra.mxu0 %v32
    %236 = vmatprep.subr.mxu0 0.0
    %237 = vmatpush2.msra.mxu0 0.0
    %238 = vmatprep.subr.mxu0 0.0
    %239 = vmatpush2.msra.mxu0 0.0
    %240 = vmatprep.subr.mxu0 0.0
    %241 = vmatpush2.msra.mxu0 0.0
    %242 = vmatprep.subr.mxu0 0.0
    %243 = vmatpush2.msra.mxu0 0.0
    %244 = vmatprep.subr.mxu0 0.0
    %245 = vmatpush2.msra.mxu0 0.0
    %246 = vmatprep.subr.mxu0 0.0
    %247 = vmatpush2.msra.mxu0 0.0
    %248 = vmatprep.subr.mxu0 0.0
    %249 = vmatpush2.msra.mxu0 0.0
    %250 = vmatprep.subr.mxu0 0.0
    %251 = vmatpush2.msra.mxu0 0.0
    %252 = vmatprep.subr.mxu0 0.0
    %253 = vmatpush2.msra.mxu0 0.0
    %254 = vmatprep.subr.mxu0 0.0
    %255 = vmatpush2.msra.mxu0 0.0
    %256 = vmatprep.subr.mxu0 0.0
    %257 = vmatpush2.msra.mxu0 0.0
    %258 = vmatprep.subr.mxu0 0.0
    %259 = vmatpush2.msra.mxu0 0.0
    %260 = vmatprep.subr.mxu0 0.0
    %261 = vmatpush2.msra.mxu0 0.0
    %262 = vmatprep.subr.mxu0 0.0
    %263 = vmatpush2.msra.mxu0 0.0
    %264 = vmatprep.subr.mxu0 0.0
    %265 = vmatpush2.msra.mxu0 0.0
    %266 = vmatprep.subr.mxu0 0.0
    %267 = vmatpush2.msra.mxu0 0.0
    %268 = vmatprep.mubr.f32.mxu0 0.0
    %269 = vmatmul.mubr.f32.gmra.mxu0 %v202
    %v270 = vpop.f32.mrf.mxu0
    %v271 = vadd.f32 %v200, %v270
    %v272 = vpop.f32.mrf.mxu0
    %273 = vdwg.mxu0
    %v274 = vtanh.pop %v271
    %v275 = vmax.f32 %v274, -20.0
    %v276 = vmin.f32 %v275, 2.0
    %v277 = vmul.f32 %v276, 1.442695
    %v278 = vpow.pop %v277
    %279 = vrot.lane.b32.xlu0 %v25, 116
    %v280 = vpop.permute.xlu0 %279
    %v282 = vmul.f32 %v278, %v280
    %284 = vrot.lane.b32.xlu0 %v282, 124
    %v285 = vpop.permute.xlu0 %284
    %v287 = vadd.f32 %v274, %v285
    %v288 = vtanh.pop %v287
    %v289 = vtanh.pop %v274
    %v290 = vmul.f32 %v25, -0.5
    %v291 = vmul.f32 %v290, %v25
    %293 = vrot.lane.b32.xlu0 %v276, 12
    %v294 = vpop.permute.xlu0 %293
    %v296 = vsub.f32 %v291, %v294
    %v297 = vsub.f32 %v296, 0.9189385
    %v298 = vsub.f32 0.6931472, %v287
    %v299 = vmul.f32 %v287, -2.0
    %v300 = vmax.f32 %v299, 0.0
    %vm301 = vcmp.ne.f32.partialorder %v299, %v299
    %v302 = vadd.f32 %v299, 0.0
    %v303 = vand.u32 2147483647, %v299
    %v304 = vsub.f32 0.0, %v303
    %v305 = vmul.f32 %v304, 1.442695
    %v306 = vpow.pop %v305
    %v307 = vadd.f32 %v306, 1.0
    %v308 = vlog2.pop %v307
    %v309 = vmul.f32 %v308, 0.6931472
    %v310 = vmul.f32 -0.5, %v306
    %v311 = vadd.f32 %v310, 1.0
    %v312 = vmul.f32 %v311, %v306
    %v313 = vand.u32 2147483647, %v306
    %vm314 = vcmp.lt.f32.partialorder %v313, 0.0004427343
    %v315 = vsel %vm314, %v312, %v309
    %v316 = vadd.f32 %v300, %v315
    %v317 = vsel %vm301, %v302, %v316
    %v318 = vsub.f32 %v298, %v317
    %v319 = vmul.f32 %v318, 2.0
    %321 = vrot.lane.b32.xlu0 %v319, 16
    %v322 = vpop.permute.xlu0 %321
    %v324 = vsub.f32 %v297, %v322
    %326 = vrot.lane.b32.xlu0 %v324, 112
    %v327 = vpop.permute.xlu0 %326
    %vm329 = vcmask 31744
    %v330 = vsel %vm329, %v327, 0.0
    %331 = vadd.xlane.f32.xlu0 %v330
    %v332 = vpop.xlane.xlu0 %331
    %334 = vrot.lane.b32.xlu0 %v289, 4
    %v335 = vpop.permute.xlu0 %334
    %v337 = vsel %vm329, %v288, %v335
    %vm338 = vcmask 64512
    %v339 = vsel %vm338, %v337, %v332
    %vm340 = vcmask 72704
    %341 = vst.msk [vmem:[%s2] sm:$0xff] %vm340, %v339
    // Predicated region
    $region14: #{stochastic_policy_forward.1} parent=1 // pred_check
      _
    $region15: #{stochastic_policy_forward.1} parent=1 // pred_check_branch
      %343 = sbr.rel (0) target = $region17
    $region16: #{stochastic_policy_forward.1} parent=1 // pred_region
      _
    $region17: #{stochastic_policy_forward.1} parent=1 // pred_fallthru
      _
    // Predicated region
    $region18: #{stochastic_policy_forward.1} parent=1 // pred_check
      _
    $region19: #{stochastic_policy_forward.1} parent=1 // pred_check_branch
      %345 = sbr.rel (0) target = $region21
    $region20: #{stochastic_policy_forward.1} parent=1 // pred_region
      _
    $region21: #{stochastic_policy_forward.1} parent=1 // pred_fallthru
      _
    %346 = vsyncpa [#allocation3], 1

</llo_original>
